<compile_context>
chip_gen: v5e
topology: v5e:2x2
jax: 0.10.0
libtpu: 0.0.40
codegen_flags: <defaults>
</compile_context>

<pallas_src>
import functools

import jax
import jax.numpy as jnp
from jax.experimental import pallas as pl
from jax.experimental.pallas import tpu as pltpu

LANE = 128


def _round_up(x, m):
    return (x + m - 1) // m * m


def _head_kernel(x_ref, w1_ref, g_ref, beta_ref, w2_ref, b2_ref,
                 w3_ref, b3_ref, out_ref, *, num_branches, batch):
    """Fused ProjectionModel + PrototypeModel head, all branches in one step.

    x:      [G*B, Dinp] bf16   packed [img || txt], zero lane padding
    W1:     [Dinp, Hp]  bf16   (Linear-1 weight; bias dropped: cancels under BN)
    g,beta: [1, Hp]     f32    BatchNorm1d affine (eps=1e-12, batch stats)
    W2:     [Hp, H2p]   bf16   b2: [1, H2p] f32
    W3:     [H2p, Op]   bf16   b3: [1, Op]  f32
    out:    [G*B, Op]   f32    (Op lane-dense, padding sliced off by wrapper)
    """
    G, B = num_branches, batch
    gamma = g_ref[...]
    beta = beta_ref[...]

    # Linear 1 on the MXU: one matmul for ALL branches (bf16 in, f32 acc).
    h = jnp.dot(x_ref[...], w1_ref[...], preferred_element_type=jnp.float32)

    # BatchNorm1d(hid, eps=1e-12), training-mode biased batch statistics,
    # computed PER BRANCH via static sublane slices (B is a multiple of the
    # 8-row tile, so slices/concat are tile-aligned). gamma folded into scale.
    branches = []
    for g in range(G):
        hb = h[g * B:(g + 1) * B, :]
        mean = jnp.mean(hb, axis=0, keepdims=True)
        c = hb - mean
        var = jnp.mean(c * c, axis=0, keepdims=True)
        scale = gamma * jax.lax.rsqrt(var + 1e-12)
        branches.append(jnp.maximum(c * scale + beta, 0.0))   # BN + ReLU
    h = branches[0] if G == 1 else jnp.concatenate(branches, axis=0)

    # Linear 2 (hid -> hid//2), bf16 into the MXU, f32 accumulate.
    z = (jnp.dot(h.astype(w2_ref.dtype), w2_ref[...],
                 preferred_element_type=jnp.float32) + b2_ref[...])

    # F.normalize(dim=1, p=2): z / max(||z||, 1e-12) == z * rsqrt(max(||z||^2, 1e-24))
    sq = jnp.sum(z * z, axis=1, keepdims=True)
    z = z * jax.lax.rsqrt(jnp.maximum(sq, 1e-24))

    # PrototypeModel: Linear 3 (hid//2 -> out_dim).
    out_ref[...] = (jnp.dot(z.astype(w3_ref.dtype), w3_ref[...],
                            preferred_element_type=jnp.float32) + b3_ref[...])


@functools.partial(jax.jit, static_argnames=("num_branches", "batch", "out_dim"))
def _head_call(joint, padded_params, num_branches, batch, out_dim):
    """Runs the fused head for `num_branches` branches stacked along batch."""
    w1, g, beta, w2, b2, w3, b3 = padded_params
    gb = joint.shape[0]
    op = w3.shape[1]

    kernel = functools.partial(
        _head_kernel, num_branches=num_branches, batch=batch)

    vmem = pl.BlockSpec(memory_space=pltpu.MemorySpace.VMEM)
    out = pl.pallas_call(
        kernel,
        out_shape=jax.ShapeDtypeStruct((gb, op), jnp.float32),
        in_specs=[vmem] * 8,      # gridless: whole (tiny) arrays live once in VMEM
        out_specs=vmem,
    )(joint, w1, g, beta, w2, b2, w3, b3)

    return out[:, :out_dim]       # strip lane padding


def discourse_forward(high_res_feats, low_res_feats, text_feats,
                      padded_params, out_dim, is_supervised):
    """Mirrors DiscourseModel.forward -> (teach_logits, stud_logits).

    *_feats stand in for clip_model.encode_image / encode_text outputs and stay
    in their narrow dtype (bf16) until they hit the kernel.
    """
    B = text_feats.shape[0]
    din = high_res_feats.shape[1] + text_feats.shape[1]
    dinp = _round_up(din, LANE)

    def pack(img):
        # torch.cat([image_features, text_features], axis=1), lane-padded.
        j = jnp.concatenate([img, text_feats], axis=1).astype(jnp.bfloat16)
        return jnp.pad(j, ((0, 0), (0, dinp - din)))

    if is_supervised:
        joint = pack(high_res_feats)                          # [B, Dinp]
        out = _head_call(joint, padded_params, 1, B, out_dim)
        return out, None
    else:
        # Teacher (high-res, detached) + student (low-res) stacked along batch
        # -> ONE kernel invocation; per-branch BN stats inside the kernel.
        joint = jnp.concatenate(
            [pack(jax.lax.stop_gradient(high_res_feats)), pack(low_res_feats)],
            axis=0)                                           # [2B, Dinp]
        out = _head_call(joint, padded_params, 2, B, out_dim)
        orig_logits = jax.lax.stop_gradient(out[:B])          # teacher detached
        aug_logits = out[B:]
        return orig_logits, aug_logits


def init_params(key, joint_in_dim, joint_hid_dim, joint_out_dim):
    """Deterministic synthetic parameters matching the module's __init__ shapes."""
    ks = jax.random.split(key, 6)
    H, H2 = joint_hid_dim, joint_hid_dim // 2
    s1 = 1.0 / jnp.sqrt(joint_in_dim)
    s2 = 1.0 / jnp.sqrt(H)
    s3 = 1.0 / jnp.sqrt(H2)
    w1 = jax.random.uniform(ks[0], (joint_in_dim, H), jnp.float32, -s1, s1)
    b1 = jax.random.uniform(ks[1], (1, H), jnp.float32, -s1, s1)
    g = jnp.ones((1, H), jnp.float32)          # BatchNorm1d weight
    beta = jnp.zeros((1, H), jnp.float32)      # BatchNorm1d bias
    w2 = jax.random.uniform(ks[2], (H, H2), jnp.float32, -s2, s2)
    b2 = jax.random.uniform(ks[3], (1, H2), jnp.float32, -s2, s2)
    w3 = jax.random.uniform(ks[4], (H2, joint_out_dim), jnp.float32, -s3, s3)
    b3 = jax.random.uniform(ks[5], (1, joint_out_dim), jnp.float32, -s3, s3)
    return (w1, b1, g, beta, w2, b2, w3, b3)


def prepare_params(params, lane=LANE):
    """Zero-pad all feature dims to lane multiples; store matmul weights in bf16.

    b1 is intentionally dropped: under batch-stat BatchNorm,
    (Wx + b1) - mean(Wx + b1) == Wx - mean(Wx), so it cancels exactly.
    gamma MUST be zero-padded (padded channels: var=0 -> scale = 0 * 1e6 = 0).
    """
    w1, _b1, g, beta, w2, b2, w3, b3 = params
    din, H = w1.shape
    H2 = w2.shape[1]
    O = w3.shape[1]
    dinp = _round_up(din, lane)
    Hp, H2p, Op = _round_up(H, lane), _round_up(H2, lane), _round_up(O, lane)

    def pad(a, shape):
        out = jnp.zeros(shape, a.dtype)
        return out.at[tuple(slice(0, s) for s in a.shape)].set(a)

    return (pad(w1, (dinp, Hp)).astype(jnp.bfloat16),
            pad(g, (1, Hp)), pad(beta, (1, Hp)),
            pad(w2, (Hp, H2p)).astype(jnp.bfloat16), pad(b2, (1, H2p)),
            pad(w3, (H2p, Op)).astype(jnp.bfloat16), pad(b3, (1, Op)))


def _reference_head(img, txt, params):
    """Pure-JAX reference matching the PyTorch forward (training-mode BN)."""
    w1, b1, g, beta, w2, b2, w3, b3 = params
    x = jnp.concatenate([img, txt], axis=1).astype(jnp.float32)
    h = x @ w1 + b1
    mean = jnp.mean(h, axis=0, keepdims=True)
    var = jnp.mean((h - mean) ** 2, axis=0, keepdims=True)
    h = g * (h - mean) * jax.lax.rsqrt(var + 1e-12) + beta
    h = jnp.maximum(h, 0.0)
    z = h @ w2 + b2
    norm = jnp.sqrt(jnp.sum(z * z, axis=1, keepdims=True))
    z = z / jnp.maximum(norm, 1e-12)
    return z @ w3 + b3


def _quantize_like_kernel(params):
    """Same params but with matmul weights rounded to bf16 (as stored)."""
    w1, b1, g, beta, w2, b2, w3, b3 = params
    q = lambda w: w.astype(jnp.bfloat16).astype(jnp.float32)
    return (q(w1), b1, g, beta, q(w2), b2, q(w3), b3)


if __name__ == "__main__":
    # Small shapes consistent with the forward:
    #   image features [B, 16], text features [B, 16] -> joint_in_dim = 32
    #   joint_hid_dim = 32 (projection output dim = 16), joint_out_dim = 16
    B, IMG_D, TXT_D = 8, 16, 16
    JOINT_IN, JOINT_HID, JOINT_OUT = IMG_D + TXT_D, 32, 16

    key = jax.random.PRNGKey(0)
    k_img_hi, k_img_lo, k_txt, k_params = jax.random.split(key, 4)

    # Synthetic stand-ins for CLIP encode_image / encode_text outputs, kept in
    # the narrow native dtype (bf16, standing in for CLIP fp16) — no wrapper
    # f32 upcast, narrow HBM->VMEM DMA.
    high_res_feats = jax.random.normal(k_img_hi, (B, IMG_D), jnp.bfloat16)
    low_res_feats = jax.random.normal(k_img_lo, (B, IMG_D), jnp.bfloat16)
    text_feats = jax.random.normal(k_txt, (B, TXT_D), jnp.bfloat16)

    raw_params = init_params(k_params, JOINT_IN, JOINT_HID, JOINT_OUT)
    padded_params = prepare_params(raw_params)

    # Supervised path: (teach_logits, None)
    teach_sup, stud_sup = discourse_forward(
        high_res_feats, low_res_feats, text_feats, padded_params, JOINT_OUT,
        is_supervised=True)
    teach_sup = jax.block_until_ready(teach_sup)
    assert teach_sup.shape == (B, JOINT_OUT) and stud_sup is None

    # Unsupervised path: teacher + student fused in ONE gridless pallas_call.
    teach_uns, stud_uns = discourse_forward(
        high_res_feats, low_res_feats, text_feats, padded_params, JOINT_OUT,
        is_supervised=False)
    teach_uns = jax.block_until_ready(teach_uns)
    stud_uns = jax.block_until_ready(stud_uns)
    assert teach_uns.shape == (B, JOINT_OUT)
    assert stud_uns.shape == (B, JOINT_OUT)
    assert bool(jnp.all(jnp.isfinite(teach_uns)))
    assert bool(jnp.all(jnp.isfinite(stud_uns)))

    # Numerical checks.
    hi32 = high_res_feats.astype(jnp.float32)
    lo32 = low_res_feats.astype(jnp.float32)
    tx32 = text_feats.astype(jnp.float32)

    # (a) Tight check vs. a reference using the SAME stored (bf16-rounded)
    #     weights: verifies the kernel math (remaining delta is only the bf16
    #     activation feed into the MXU).
    q_params = _quantize_like_kernel(raw_params)
    ref_q_hi = _reference_head(hi32, tx32, q_params)
    ref_q_lo = _reference_head(lo32, tx32, q_params)
    assert bool(jnp.allclose(teach_sup, ref_q_hi, rtol=1e-2, atol=1e-2))
    assert bool(jnp.allclose(teach_uns, ref_q_hi, rtol=1e-2, atol=1e-2))
    assert bool(jnp.allclose(stud_uns, ref_q_lo, rtol=1e-2, atol=1e-2))

    # (b) Loose check vs. the full-f32 module reference: delta is dominated by
    #     bf16 weight storage (intentional mixed-precision choice).
    ref_f_hi = _reference_head(hi32, tx32, raw_params)
    ref_f_lo = _reference_head(lo32, tx32, raw_params)
    assert bool(jnp.allclose(teach_uns, ref_f_hi, rtol=4e-2, atol=4e-2))
    assert bool(jnp.allclose(stud_uns, ref_f_lo, rtol=4e-2, atol=4e-2))

    print("KERNEL_OK")
</pallas_src>

<mosaic_0001>
module attributes {stable_mosaic.version = 11 : i64} {
  func.func @_head_kernel(%arg0: memref<8x128xbf16, #tpu.memory_space<vmem>>, %arg1: memref<128x128xbf16, #tpu.memory_space<vmem>>, %arg2: memref<1x128xf32, #tpu.memory_space<vmem>>, %arg3: memref<1x128xf32, #tpu.memory_space<vmem>>, %arg4: memref<128x128xbf16, #tpu.memory_space<vmem>>, %arg5: memref<1x128xf32, #tpu.memory_space<vmem>>, %arg6: memref<128x128xbf16, #tpu.memory_space<vmem>>, %arg7: memref<1x128xf32, #tpu.memory_space<vmem>>, %arg8: memref<8x128xf32, #tpu.memory_space<vmem>>) attributes {dimension_semantics = [], scalar_prefetch = 0 : i64, scratch_operands = 0 : i64, tpu.core_type = #tpu.core_type<tc>} {
    %c0 = arith.constant 0 : index
    %c0_0 = arith.constant 0 : index
    %0 = vector.load %arg2[%c0, %c0_0] : memref<1x128xf32, #tpu.memory_space<vmem>>, vector<1x128xf32>
    %c0_1 = arith.constant 0 : index
    %c0_2 = arith.constant 0 : index
    %1 = vector.load %arg3[%c0_1, %c0_2] : memref<1x128xf32, #tpu.memory_space<vmem>>, vector<1x128xf32>
    %c0_3 = arith.constant 0 : index
    %c0_4 = arith.constant 0 : index
    %2 = vector.load %arg0[%c0_3, %c0_4] : memref<8x128xbf16, #tpu.memory_space<vmem>>, vector<8x128xbf16>
    %c0_5 = arith.constant 0 : index
    %c0_6 = arith.constant 0 : index
    %3 = vector.load %arg1[%c0_5, %c0_6] : memref<128x128xbf16, #tpu.memory_space<vmem>>, vector<128x128xbf16>
    %cst = arith.constant dense<0.000000e+00> : vector<8x128xf32>
    %4 = tpu.matmul %2, %3, %cst {dimension_numbers = #tpu.dot_dimension_numbers<[1], [0], [0], [1], [0, 0, 1, 1], [], []>} : vector<8x128xbf16>, vector<128x128xbf16>, vector<8x128xf32> -> vector<8x128xf32>
    %cst_7 = arith.constant dense<0.000000e+00> : vector<128xf32>
    %5 = vector.multi_reduction <add>, %4, %cst_7 [0] : vector<8x128xf32> to vector<128xf32>
    %6 = vector.shape_cast %5 : vector<128xf32> to vector<1x128xf32>
    %cst_8 = arith.constant 8.000000e+00 : f32
    %7 = vector.broadcast %cst_8 : f32 to vector<1x128xf32>
    %8 = arith.divf %6, %7 : vector<1x128xf32>
    %9 = vector.broadcast %8 : vector<1x128xf32> to vector<8x128xf32>
    %10 = arith.subf %4, %9 : vector<8x128xf32>
    %11 = arith.mulf %10, %10 : vector<8x128xf32>
    %cst_9 = arith.constant dense<0.000000e+00> : vector<128xf32>
    %12 = vector.multi_reduction <add>, %11, %cst_9 [0] : vector<8x128xf32> to vector<128xf32>
    %13 = vector.shape_cast %12 : vector<128xf32> to vector<1x128xf32>
    %cst_10 = arith.constant 8.000000e+00 : f32
    %14 = vector.broadcast %cst_10 : f32 to vector<1x128xf32>
    %15 = arith.divf %13, %14 : vector<1x128xf32>
    %cst_11 = arith.constant 9.99999996E-13 : f32
    %16 = vector.broadcast %cst_11 : f32 to vector<1x128xf32>
    %17 = arith.addf %15, %16 : vector<1x128xf32>
    %18 = math.rsqrt %17 : vector<1x128xf32>
    %19 = arith.mulf %0, %18 : vector<1x128xf32>
    %20 = vector.broadcast %19 : vector<1x128xf32> to vector<8x128xf32>
    %21 = arith.mulf %10, %20 : vector<8x128xf32>
    %22 = vector.broadcast %1 : vector<1x128xf32> to vector<8x128xf32>
    %23 = arith.addf %21, %22 : vector<8x128xf32>
    %cst_12 = arith.constant 0.000000e+00 : f32
    %24 = vector.broadcast %cst_12 : f32 to vector<8x128xf32>
    %25 = arith.maximumf %23, %24 : vector<8x128xf32>
    %26 = arith.truncf %25 : vector<8x128xf32> to vector<8x128xbf16>
    %c0_13 = arith.constant 0 : index
    %c0_14 = arith.constant 0 : index
    %27 = vector.load %arg4[%c0_13, %c0_14] : memref<128x128xbf16, #tpu.memory_space<vmem>>, vector<128x128xbf16>
    %cst_15 = arith.constant dense<0.000000e+00> : vector<8x128xf32>
    %28 = tpu.matmul %26, %27, %cst_15 {dimension_numbers = #tpu.dot_dimension_numbers<[1], [0], [0], [1], [0, 0, 1, 1], [], []>} : vector<8x128xbf16>, vector<128x128xbf16>, vector<8x128xf32> -> vector<8x128xf32>
    %c0_16 = arith.constant 0 : index
    %c0_17 = arith.constant 0 : index
    %29 = vector.load %arg5[%c0_16, %c0_17] : memref<1x128xf32, #tpu.memory_space<vmem>>, vector<1x128xf32>
    %30 = vector.broadcast %29 : vector<1x128xf32> to vector<8x128xf32>
    %31 = arith.addf %28, %30 : vector<8x128xf32>
    %32 = arith.mulf %31, %31 : vector<8x128xf32>
    %cst_18 = arith.constant dense<0.000000e+00> : vector<8xf32>
    %33 = vector.multi_reduction <add>, %32, %cst_18 [1] : vector<8x128xf32> to vector<8xf32>
    %34 = vector.shape_cast %33 : vector<8xf32> to vector<8x1xf32>
    %cst_19 = arith.constant 1.000000e-24 : f32
    %35 = vector.broadcast %cst_19 : f32 to vector<8x1xf32>
    %36 = arith.maximumf %34, %35 : vector<8x1xf32>
    %37 = math.rsqrt %36 : vector<8x1xf32>
    %38 = vector.broadcast %37 : vector<8x1xf32> to vector<8x128xf32>
    %39 = arith.mulf %31, %38 : vector<8x128xf32>
    %40 = arith.truncf %39 : vector<8x128xf32> to vector<8x128xbf16>
    %c0_20 = arith.constant 0 : index
    %c0_21 = arith.constant 0 : index
    %41 = vector.load %arg6[%c0_20, %c0_21] : memref<128x128xbf16, #tpu.memory_space<vmem>>, vector<128x128xbf16>
    %cst_22 = arith.constant dense<0.000000e+00> : vector<8x128xf32>
    %42 = tpu.matmul %40, %41, %cst_22 {dimension_numbers = #tpu.dot_dimension_numbers<[1], [0], [0], [1], [0, 0, 1, 1], [], []>} : vector<8x128xbf16>, vector<128x128xbf16>, vector<8x128xf32> -> vector<8x128xf32>
    %c0_23 = arith.constant 0 : index
    %c0_24 = arith.constant 0 : index
    %43 = vector.load %arg7[%c0_23, %c0_24] : memref<1x128xf32, #tpu.memory_space<vmem>>, vector<1x128xf32>
    %44 = vector.broadcast %43 : vector<1x128xf32> to vector<8x128xf32>
    %45 = arith.addf %42, %44 : vector<8x128xf32>
    %c0_25 = arith.constant 0 : index
    %c0_26 = arith.constant 0 : index
    %46 = vector.load %arg8[%c0_25, %c0_26] : memref<8x128xf32, #tpu.memory_space<vmem>>, vector<8x128xf32>
    tpu.vector_store %arg8[%c0_25, %c0_26], %45 {strides = array<i32>} : memref<8x128xf32, #tpu.memory_space<vmem>>, vector<8x128xf32>,
    return
  }
}

</mosaic_0001>

<llo_original>
// kernel: _head_call.1
$region0: #{_head_call.1}
  #allocation0 [shape = 'u32[]', space=smem, size = 0x4, offset = 0x4, fixed_abs, tag = 'smem constant byte address 0x4 - core index']
  #allocation1 [shape = 'u32[72,128]{1,0:T(1,128)}', space=vmem, size = 0x9000, scoped, tag = 'internal scratch']
  %s0 = inlined_call_operand.hbm [shape: bf16[8,128], index: 0, kind: input, shape index: {}]
  %s1 = inlined_call_operand.hbm [shape: bf16[128,128], index: 1, kind: input, shape index: {}]
  %s2 = inlined_call_operand.vmem [shape: f32[1,128], index: 2, kind: input, shape index: {}]
  %s3 = inlined_call_operand.vmem [shape: f32[1,128], index: 3, kind: input, shape index: {}]
  %s4 = inlined_call_operand.hbm [shape: bf16[128,128], index: 4, kind: input, shape index: {}]
  %s5 = inlined_call_operand.vmem [shape: f32[1,128], index: 5, kind: input, shape index: {}]
  %s6 = inlined_call_operand.hbm [shape: bf16[128,128], index: 6, kind: input, shape index: {}]
  %s7 = inlined_call_operand.vmem [shape: f32[1,128], index: 7, kind: input, shape index: {}]
  %s8 = inlined_call_operand.hbm [shape: f32[8,128], index: 8, kind: output, shape index: {}]
  %s9 = sld [smem:[#allocation0]]
  $region58: #{_head_call.1} parent=0
    _
  %s11 = ssub.s32 1, %s9
  %s12 = scalar_select 0, %s11, %s9
  $region1: #{_head_call.1} parent=0
    #allocation2 [shape = 'u8[2048]{0}', space=vmem, size = 0x800, scoped, tag = 'input window, operand 0, single buffered']
    #allocation3 [shape = 's32[1]{0}', space=sflag, size = 0x4, scoped, tag = 'scoped memory for _head_call.1']
    #allocation4 [shape = 's32[1]{0}', space=sflag, size = 0x4, scoped, tag = 'scoped memory for _head_call.1']
    #allocation5 [shape = 'u8[32768]{0}', space=vmem, size = 0x8000, scoped, tag = 'input window, operand 1, single buffered']
    #allocation6 [shape = 's32[1]{0}', space=sflag, size = 0x4, scoped, tag = 'scoped memory for _head_call.1']
    #allocation7 [shape = 'u8[32768]{0}', space=vmem, size = 0x8000, scoped, tag = 'input window, operand 4, single buffered']
    #allocation8 [shape = 'u8[32768]{0}', space=vmem, size = 0x8000, scoped, tag = 'input window, operand 6, single buffered']
    #allocation9 [shape = 's32[1]{0}', space=sflag, size = 0x4, scoped, tag = 'scoped memory for _head_call.1']
    #allocation10 [shape = 'u8[4096]{0}', space=vmem, size = 0x1000, scoped, tag = 'output window, operand 0, single buffered']
    %13 = vsyncpa [#allocation3], 0
    %14 = vsyncpa [#allocation6], 0
    %15 = vsyncpa [#allocation9], 0
    %16 = vsyncpa [#allocation4], 0
    // Predicated region
    $region2: #{_head_call.1} parent=1 // pred_check
      _
    $region3: #{_head_call.1} parent=1 // pred_check_branch
      %18 = sbr.rel (0) target = $region5
    $region4: #{_head_call.1} parent=1 // pred_region
      %20 = vsyncadd [#allocation3], 0
      %s22 = sshll.u32 %s0, 4
      %s23 = int_to_ptr.hbm [resolvable:$true] %s22
      %s24 = sshll.u32 [#allocation2], 4
      %s25 = int_to_ptr.vmem [resolvable:$true] %s24
      %27 = dma.hbm_to_vmem [thread:$0]  %s23, 64, %s25, [#allocation3]
    $region5: #{_head_call.1} parent=1 // pred_fallthru
      _
    // Predicated region
    $region6: #{_head_call.1} parent=1 // pred_check
      _
    $region7: #{_head_call.1} parent=1 // pred_check_branch
      %29 = sbr.rel (0) target = $region9
    $region8: #{_head_call.1} parent=1 // pred_region
      %31 = vsyncadd [#allocation6], 0
      %s32 = sshll.u32 %s1, 4
      %s33 = int_to_ptr.hbm [resolvable:$true] %s32
      %s34 = sshll.u32 [#allocation5], 4
      %s35 = int_to_ptr.vmem [resolvable:$true] %s34
      %40 = dma.hbm_to_vmem [thread:$0]  %s33, 1024, %s35, [#allocation6], 64, 64, 4
    $region9: #{_head_call.1} parent=1 // pred_fallthru
      _
    // Predicated region
    $region10: #{_head_call.1} parent=1 // pred_check
      _
    $region11: #{_head_call.1} parent=1 // pred_check_branch
      %42 = sbr.rel (0) target = $region13
    $region12: #{_head_call.1} parent=1 // pred_region
      _
    $region13: #{_head_call.1} parent=1 // pred_fallthru
      _
    // Predicated region
    $region14: #{_head_call.1} parent=1 // pred_check
      _
    $region15: #{_head_call.1} parent=1 // pred_check_branch
      %44 = sbr.rel (0) target = $region17
    $region16: #{_head_call.1} parent=1 // pred_region
      _
    $region17: #{_head_call.1} parent=1 // pred_fallthru
      _
    // Predicated region
    $region18: #{_head_call.1} parent=1 // pred_check
      _
    $region19: #{_head_call.1} parent=1 // pred_check_branch
      %46 = sbr.rel (0) target = $region21
    $region20: #{_head_call.1} parent=1 // pred_region
      %48 = vsyncadd [#allocation6], 0
      %s49 = sshll.u32 %s4, 4
      %s50 = int_to_ptr.hbm [resolvable:$true] %s49
      %s51 = sshll.u32 [#allocation7], 4
      %s52 = int_to_ptr.vmem [resolvable:$true] %s51
      %57 = dma.hbm_to_vmem [thread:$0]  %s50, 1024, %s52, [#allocation6], 64, 64, 4
    $region21: #{_head_call.1} parent=1 // pred_fallthru
      _
    // Predicated region
    $region22: #{_head_call.1} parent=1 // pred_check
      _
    $region23: #{_head_call.1} parent=1 // pred_check_branch
      %59 = sbr.rel (0) target = $region25
    $region24: #{_head_call.1} parent=1 // pred_region
      _
    $region25: #{_head_call.1} parent=1 // pred_fallthru
      _
    // Predicated region
    $region26: #{_head_call.1} parent=1 // pred_check
      _
    $region27: #{_head_call.1} parent=1 // pred_check_branch
      %61 = sbr.rel (0) target = $region29
    $region28: #{_head_call.1} parent=1 // pred_region
      %63 = vsyncadd [#allocation9], 0
      %s64 = sshll.u32 %s6, 4
      %s65 = int_to_ptr.hbm [resolvable:$true] %s64
      %s66 = sshll.u32 [#allocation8], 4
      %s67 = int_to_ptr.vmem [resolvable:$true] %s66
      %72 = dma.hbm_to_vmem [thread:$0]  %s65, 1024, %s67, [#allocation9], 64, 64, 4
    $region29: #{_head_call.1} parent=1 // pred_fallthru
      _
    // Predicated region
    $region30: #{_head_call.1} parent=1 // pred_check
      _
    $region31: #{_head_call.1} parent=1 // pred_check_branch
      %74 = sbr.rel (0) target = $region33
    $region32: #{_head_call.1} parent=1 // pred_region
      _
    $region33: #{_head_call.1} parent=1 // pred_fallthru
      _
    // Predicated region
    $region34: #{_head_call.1} parent=1 // pred_check
      _
    $region35: #{_head_call.1} parent=1 // pred_check_branch
      %76 = sbr.rel (0) target = $region37
    $region36: #{_head_call.1} parent=1 // pred_region
      %78 = dma.done [#allocation3], 64
    $region37: #{_head_call.1} parent=1 // pred_fallthru
      _
    // Predicated region
    $region38: #{_head_call.1} parent=1 // pred_check
      _
    $region39: #{_head_call.1} parent=1 // pred_check_branch
      %80 = sbr.rel (0) target = $region41
    $region40: #{_head_call.1} parent=1 // pred_region
      %82 = dma.done [#allocation6], 1024
    $region41: #{_head_call.1} parent=1 // pred_fallthru
      _
    // Predicated region
    $region42: #{_head_call.1} parent=1 // pred_check
      _
    $region43: #{_head_call.1} parent=1 // pred_check_branch
      %84 = sbr.rel (0) target = $region45
    $region44: #{_head_call.1} parent=1 // pred_region
      %86 = dma.done [#allocation6], 1024
    $region45: #{_head_call.1} parent=1 // pred_fallthru
      _
    // Predicated region
    $region46: #{_head_call.1} parent=1 // pred_check
      _
    $region47: #{_head_call.1} parent=1 // pred_check_branch
      %88 = sbr.rel (0) target = $region49
    $region48: #{_head_call.1} parent=1 // pred_region
      %90 = dma.done [#allocation9], 1024
    $region49: #{_head_call.1} parent=1 // pred_fallthru
      _
    %v91 = vld [vmem:[%s2] sm:$0x1]
    %v92 = vld [vmem:[%s3] sm:$0x1]
    %v93 = vld [vmem:[#allocation2] sm:$0xf]
    %v94 = vld [vmem:[#allocation5] sm:$0xf]
    %v95 = vld [vmem:[#allocation5 + $0x4] sm:$0xf]
    %v96 = vld [vmem:[#allocation5 + $0x8] sm:$0xf]
    %v97 = vld [vmem:[#allocation5 + $0xc] sm:$0xf]
    %v98 = vld [vmem:[#allocation5 + $0x10] sm:$0xf]
    %v99 = vld [vmem:[#allocation5 + $0x14] sm:$0xf]
    %v100 = vld [vmem:[#allocation5 + $0x18] sm:$0xf]
    %v101 = vld [vmem:[#allocation5 + $0x1c] sm:$0xf]
    %v102 = vld [vmem:[#allocation5 + $0x20] sm:$0xf]
    %v103 = vld [vmem:[#allocation5 + $0x24] sm:$0xf]
    %v104 = vld [vmem:[#allocation5 + $0x28] sm:$0xf]
    %v105 = vld [vmem:[#allocation5 + $0x2c] sm:$0xf]
    %v106 = vld [vmem:[#allocation5 + $0x30] sm:$0xf]
    %v107 = vld [vmem:[#allocation5 + $0x34] sm:$0xf]
    %v108 = vld [vmem:[#allocation5 + $0x38] sm:$0xf]
    %v109 = vld [vmem:[#allocation5 + $0x3c] sm:$0xf]
    %v126 = vunpack.c.l.b16 %v94
    %v127 = vunpack.c.l.b16 %v95
    %v128 = vunpack.c.l.b16 %v96
    %v129 = vunpack.c.l.b16 %v97
    %v130 = vunpack.c.l.b16 %v98
    %v131 = vunpack.c.l.b16 %v99
    %v132 = vunpack.c.l.b16 %v100
    %v133 = vunpack.c.l.b16 %v101
    %v134 = vunpack.c.l.b16 %v102
    %v135 = vunpack.c.l.b16 %v103
    %v136 = vunpack.c.l.b16 %v104
    %v137 = vunpack.c.l.b16 %v105
    %v138 = vunpack.c.l.b16 %v106
    %v139 = vunpack.c.l.b16 %v107
    %v140 = vunpack.c.l.b16 %v108
    %v141 = vunpack.c.l.b16 %v109
    %v142 = vpack.c.b16 %v127, %v126
    %v143 = vpack.c.b16 %v129, %v128
    %v144 = vpack.c.b16 %v131, %v130
    %v145 = vpack.c.b16 %v133, %v132
    %v146 = vpack.c.b16 %v135, %v134
    %v147 = vpack.c.b16 %v137, %v136
    %v148 = vpack.c.b16 %v139, %v138
    %v149 = vpack.c.b16 %v141, %v140
    %158 = vmatpush.bf16.msra.mxu0 %v149
    %159 = vmatpush.bf16.msra.mxu0 %v148
    %160 = vmatpush.bf16.msra.mxu0 %v147
    %161 = vmatpush.bf16.msra.mxu0 %v146
    %162 = vmatpush.bf16.msra.mxu0 %v145
    %163 = vmatpush.bf16.msra.mxu0 %v144
    %164 = vmatpush.bf16.msra.mxu0 %v143
    %165 = vmatpush.bf16.msra.mxu0 %v142
    %166 = vmatmul.bf16.gmra.mxu0 %v93
    %v167 = vpop.f32.mrf.mxu0
    %v168 = vadd.f32 0.0, %v167
    %v169 = vpop.f32.mrf.mxu0
    %170 = vdwg.mxu0
    %v171 = vrot.slane %v168, 4
    %v172 = vadd.f32 %v168, %v171
    %v173 = vrot.slane %v172, 2
    %v174 = vadd.f32 %v172, %v173
    %v175 = vrot.slane %v174, 1
    %v176 = vadd.f32 %v174, %v175
    %v177 = vrcp.pop 8.0
    %v178 = vmul.f32 8.0, %v177
    %v179 = vsub.f32 1.0, %v178
    %v180 = vmul.f32 %v177, %v179
    %v181 = vadd.f32 %v177, %v180
    %vm182 = vweird.f32 %v177
    %v183 = vsel %vm182, %v177, %v181
    %v184 = vmul.f32 %v176, %v183
    %v185 = vsub.f32 %v168, %v184
    %v186 = vmul.f32 %v185, %v185
    %v187 = vrot.slane %v186, 4
    %v188 = vadd.f32 %v186, %v187
    %v189 = vrot.slane %v188, 2
    %v190 = vadd.f32 %v188, %v189
    %v191 = vrot.slane %v190, 1
    %v192 = vadd.f32 %v190, %v191
    %v193 = vmul.f32 %v192, %v183
    %v194 = vadd.f32 %v193, 1e-12
    %v195 = vrsqrt.pop %v194
    %v196 = vmul.f32 %v195, %v194
    %v197 = vmul.f32 %v196, %v195
    %v198 = vmul.f32 0.5, %v197
    %v199 = vsub.f32 1.5, %v198
    %v200 = vmul.f32 %v195, %v199
    %vm201 = vweird.f32 %v194
    %vm202 = vweird.f32 %v195
    %vm203 = vmor %vm201, %vm202
    %v204 = vsel %vm203, %v195, %v200
    %v205 = vmul.f32 %v91, %v204
    %v207 = vperm.slane %v205, 0
    %v209 = vmul.f32 %v185, %v207
    %v211 = vperm.slane %v92, 0
    %v213 = vadd.f32 %v209, %v211
    %v214 = vmax.f32 %v213, 0.0
    %v215 = vpack.c.bf16 %v214, %v214
    %v216 = vld [vmem:[#allocation7] sm:$0xf]
    %v217 = vld [vmem:[#allocation7 + $0x4] sm:$0xf]
    %v218 = vld [vmem:[#allocation7 + $0x8] sm:$0xf]
    %v219 = vld [vmem:[#allocation7 + $0xc] sm:$0xf]
    %v220 = vld [vmem:[#allocation7 + $0x10] sm:$0xf]
    %v221 = vld [vmem:[#allocation7 + $0x14] sm:$0xf]
    %v222 = vld [vmem:[#allocation7 + $0x18] sm:$0xf]
    %v223 = vld [vmem:[#allocation7 + $0x1c] sm:$0xf]
    %v224 = vld [vmem:[#allocation7 + $0x20] sm:$0xf]
    %v225 = vld [vmem:[#allocation7 + $0x24] sm:$0xf]
    %v226 = vld [vmem:[#allocation7 + $0x28] sm:$0xf]
    %v227 = vld [vmem:[#allocation7 + $0x2c] sm:$0xf]
    %v228 = vld [vmem:[#allocation7 + $0x30] sm:$0xf]
    %v229 = vld [vmem:[#allocation7 + $0x34] sm:$0xf]
    %v230 = vld [vmem:[#allocation7 + $0x38] sm:$0xf]
    %v231 = vld [vmem:[#allocation7 + $0x3c] sm:$0xf]
    %v232 = vld [vmem:[%s5] sm:$0x1]
    %v234 = vperm.slane %v232, 0
    %v252 = vunpack.c.l.b16 %v216
    %v253 = vunpack.c.l.b16 %v217
    %v254 = vunpack.c.l.b16 %v218
    %v255 = vunpack.c.l.b16 %v219
    %v256 = vunpack.c.l.b16 %v220
    %v257 = vunpack.c.l.b16 %v221
    %v258 = vunpack.c.l.b16 %v222
    %v259 = vunpack.c.l.b16 %v223
    %v260 = vunpack.c.l.b16 %v224
    %v261 = vunpack.c.l.b16 %v225
    %v262 = vunpack.c.l.b16 %v226
    %v263 = vunpack.c.l.b16 %v227
    %v264 = vunpack.c.l.b16 %v228
    %v265 = vunpack.c.l.b16 %v229
    %v266 = vunpack.c.l.b16 %v230
    %v267 = vunpack.c.l.b16 %v231
    %v268 = vpack.c.b16 %v253, %v252
    %v269 = vpack.c.b16 %v255, %v254
    %v270 = vpack.c.b16 %v257, %v256
    %v271 = vpack.c.b16 %v259, %v258
    %v272 = vpack.c.b16 %v261, %v260
    %v273 = vpack.c.b16 %v263, %v262
    %v274 = vpack.c.b16 %v265, %v264
    %v275 = vpack.c.b16 %v267, %v266
    %284 = vmatpush.bf16.msra.mxu0 %v275
    %285 = vmatpush.bf16.msra.mxu0 %v274
    %286 = vmatpush.bf16.msra.mxu0 %v273
    %287 = vmatpush.bf16.msra.mxu0 %v272
    %288 = vmatpush.bf16.msra.mxu0 %v271
    %289 = vmatpush.bf16.msra.mxu0 %v270
    %290 = vmatpush.bf16.msra.mxu0 %v269
    %291 = vmatpush.bf16.msra.mxu0 %v268
    %292 = vmatmul.bf16.gmra.mxu0 %v215
    %v293 = vpop.f32.mrf.mxu0
    %v294 = vadd.f32 %v234, %v293
    %v295 = vpop.f32.mrf.mxu0
    %296 = vdwg.mxu0
    %v297 = vmul.f32 %v294, %v294
    %298 = vadd.xlane.f32.xlu0 %v297
    %v299 = vpop.xlane.xlu0 %298
    %v300 = vmax.f32 %v299, 1e-24
    %v301 = vrsqrt.pop %v300
    %v302 = vmul.f32 %v301, %v300
    %v303 = vmul.f32 %v302, %v301
    %v304 = vmul.f32 0.5, %v303
    %v305 = vsub.f32 1.5, %v304
    %v306 = vmul.f32 %v301, %v305
    %vm307 = vweird.f32 %v300
    %vm308 = vweird.f32 %v301
    %vm309 = vmor %vm307, %vm308
    %v310 = vsel %vm309, %v301, %v306
    %v311 = vmul.f32 %v294, %v310
    %v312 = vpack.c.bf16 %v311, %v311
    %v313 = vld [vmem:[#allocation8] sm:$0xf]
    %v314 = vld [vmem:[#allocation8 + $0x4] sm:$0xf]
    %v315 = vld [vmem:[#allocation8 + $0x8] sm:$0xf]
    %v316 = vld [vmem:[#allocation8 + $0xc] sm:$0xf]
    %v317 = vld [vmem:[#allocation8 + $0x10] sm:$0xf]
    %v318 = vld [vmem:[#allocation8 + $0x14] sm:$0xf]
    %v319 = vld [vmem:[#allocation8 + $0x18] sm:$0xf]
    %v320 = vld [vmem:[#allocation8 + $0x1c] sm:$0xf]
    %v321 = vld [vmem:[#allocation8 + $0x20] sm:$0xf]
    %v322 = vld [vmem:[#allocation8 + $0x24] sm:$0xf]
    %v323 = vld [vmem:[#allocation8 + $0x28] sm:$0xf]
    %v324 = vld [vmem:[#allocation8 + $0x2c] sm:$0xf]
    %v325 = vld [vmem:[#allocation8 + $0x30] sm:$0xf]
    %v326 = vld [vmem:[#allocation8 + $0x34] sm:$0xf]
    %v327 = vld [vmem:[#allocation8 + $0x38] sm:$0xf]
    %v328 = vld [vmem:[#allocation8 + $0x3c] sm:$0xf]
    %v329 = vld [vmem:[%s7] sm:$0x1]
    %v331 = vperm.slane %v329, 0
    %v349 = vunpack.c.l.b16 %v313
    %v350 = vunpack.c.l.b16 %v314
    %v351 = vunpack.c.l.b16 %v315
    %v352 = vunpack.c.l.b16 %v316
    %v353 = vunpack.c.l.b16 %v317
    %v354 = vunpack.c.l.b16 %v318
    %v355 = vunpack.c.l.b16 %v319
    %v356 = vunpack.c.l.b16 %v320
    %v357 = vunpack.c.l.b16 %v321
    %v358 = vunpack.c.l.b16 %v322
    %v359 = vunpack.c.l.b16 %v323
    %v360 = vunpack.c.l.b16 %v324
    %v361 = vunpack.c.l.b16 %v325
    %v362 = vunpack.c.l.b16 %v326
    %v363 = vunpack.c.l.b16 %v327
    %v364 = vunpack.c.l.b16 %v328
    %v365 = vpack.c.b16 %v350, %v349
    %v366 = vpack.c.b16 %v352, %v351
    %v367 = vpack.c.b16 %v354, %v353
    %v368 = vpack.c.b16 %v356, %v355
    %v369 = vpack.c.b16 %v358, %v357
    %v370 = vpack.c.b16 %v360, %v359
    %v371 = vpack.c.b16 %v362, %v361
    %v372 = vpack.c.b16 %v364, %v363
    %381 = vmatpush.bf16.msra.mxu0 %v372
    %382 = vmatpush.bf16.msra.mxu0 %v371
    %383 = vmatpush.bf16.msra.mxu0 %v370
    %384 = vmatpush.bf16.msra.mxu0 %v369
    %385 = vmatpush.bf16.msra.mxu0 %v368
    %386 = vmatpush.bf16.msra.mxu0 %v367
    %387 = vmatpush.bf16.msra.mxu0 %v366
    %388 = vmatpush.bf16.msra.mxu0 %v365
    %389 = vmatmul.bf16.gmra.mxu0 %v312
    %v390 = vpop.f32.mrf.mxu0
    %v391 = vadd.f32 %v331, %v390
    %v392 = vpop.f32.mrf.mxu0
    %393 = vdwg.mxu0
    %394 = vst [vmem:[#allocation10] sm:$0xff] %v391
    // Predicated region
    $region50: #{_head_call.1} parent=1 // pred_check
      _
    $region51: #{_head_call.1} parent=1 // pred_check_branch
      %396 = sbr.rel (0) target = $region53
    $region52: #{_head_call.1} parent=1 // pred_region
      %398 = vsyncadd [#allocation4], 0
      %s400 = sshll.u32 [#allocation10], 4
      %s401 = int_to_ptr.vmem [resolvable:$true] %s400
      %s402 = sshll.u32 %s8, 4
      %s403 = int_to_ptr.hbm [resolvable:$true] %s402
      %405 = dma.vmem_to_hbm [thread:$0]  %s401, 128, %s403, [#allocation4]
    $region53: #{_head_call.1} parent=1 // pred_fallthru
      _
    // Predicated region
    $region54: #{_head_call.1} parent=1 // pred_check
      _
    $region55: #{_head_call.1} parent=1 // pred_check_branch
      %407 = sbr.rel (0) target = $region57
    $region56: #{_head_call.1} parent=1 // pred_region
      %409 = dma.done [#allocation4], 128
    $region57: #{_head_call.1} parent=1 // pred_fallthru
      _
    %410 = vsyncpa [#allocation3], 1
    %411 = vsyncpa [#allocation6], 1
    %412 = vsyncpa [#allocation9], 1
    %413 = vsyncpa [#allocation4], 1

</llo_original>
